<compile_context>
chip_gen: v7x
topology: tpu7x:2x2x1
jax: 0.10.0
libtpu: 0.0.40
codegen_flags: <defaults>
</compile_context>

<pallas_src>
import functools
import math

import jax
import jax.numpy as jnp
from jax import lax
from jax.experimental import pallas as pl
from jax.experimental.pallas import tpu as pltpu

_SUB = 8     # sublane packing factor: (B, N) -> (B*8, ~N/8)
_LANE = 128  # lane width


def _round_up(x, m):
    return ((x + m - 1) // m) * m


def _dice_sums_kernel(pred_ref, gt_ref, inter_ref, gsum_ref, psum_ref,
                      inter_acc, gt_acc, pred_acc,
                      *, smooth, n_valid, n8, tn, k_chunks, apply_mask):
    """One grid step processes a (B*8, TN) chunk of the packed layout.

    Accumulates per-row intersection / gt-sum / pred-sum in VMEM scratch and
    writes the per-row partial sums on the last reduction step.
    """
    p_id = pl.program_id(0)   # parallel split of the reduction range
    k = pl.program_id(1)      # reduction step within the split

    @pl.when(k == 0)
    def _():
        inter_acc[...] = jnp.zeros_like(inter_acc)
        gt_acc[...] = jnp.zeros_like(gt_acc)
        pred_acc[...] = jnp.zeros_like(pred_acc)

    x = pred_ref[...].astype(jnp.float32)
    g = gt_ref[...].astype(jnp.float32)

    # sigmoid(x) == 0.5 * (tanh(0.5 * x) + 1): single EUP op per element.
    # Padded pred is -1e9 -> tanh saturates to -1 -> p == 0 exactly.
    p = 0.5 * (jnp.tanh(0.5 * x) + 1.0)

    # gt transform: clamp(gt - 2*smooth, min=0) + smooth
    g = jnp.maximum(g - 2.0 * smooth, 0.0) + smooth

    if apply_mask:
        # Zero transformed gt on padded elements (only needed when smooth > 0,
        # since padding would otherwise add `smooth` to gt_sum).
        rows, _ = pred_ref.shape
        sub = lax.broadcasted_iota(jnp.int32, (rows, tn), 0) % _SUB
        col = (p_id * k_chunks + k) * tn + lax.broadcasted_iota(
            jnp.int32, (rows, tn), 1)
        g = jnp.where(sub * n8 + col < n_valid, g, 0.0)

    inter_acc[...] += jnp.sum(g * p, axis=1, keepdims=True)
    gt_acc[...] += jnp.sum(g, axis=1, keepdims=True)
    pred_acc[...] += jnp.sum(p, axis=1, keepdims=True)

    @pl.when(k == pl.num_programs(1) - 1)
    def _():
        inter_ref[...] = inter_acc[...][None]
        gsum_ref[...] = gt_acc[...][None]
        psum_ref[...] = pred_acc[...][None]


def binary_dice_loss_with_sigmoid(pred, gt, *, reduction="mean", smooth=0.0):
    """JAX/Pallas equivalent of BinaryDiceLossWithSigmoid.forward.

    pred, gt: (B, 1, H, W) arrays (gt may be any dtype castable to f32,
    e.g. uint8 masks to shrink the HBM stream).
    """
    if reduction not in ("none", "mean", "sum"):
        raise ValueError("Wrong mode for reduction")
    assert 0 <= smooth < 1, "smooth value should be in [0,1]"
    assert pred.shape[0] == gt.shape[0]

    B = pred.shape[0]
    N = int(math.prod(pred.shape[1:]))
    pred_f = pred.reshape(B, N)
    gt_f = gt.reshape(B, N)

    ROWS = B * _SUB

    # Size the lane tile TN so the double-buffered inputs use ~8 MiB of VMEM.
    per_lane_bytes = 2 * ROWS * (pred_f.dtype.itemsize + gt_f.dtype.itemsize)
    budget = 8 * 1024 * 1024
    tn_cap = max(_LANE, (budget // per_lane_bytes) // _LANE * _LANE)
    n8_min = pl.cdiv(N, _SUB)
    TN = min(tn_cap, _round_up(n8_min, _LANE))

    chunks = pl.cdiv(n8_min, TN)
    P = 2 if chunks >= 2 else 1          # split reduction across 2 TCs (v7x)
    K = pl.cdiv(chunks, P)
    N8 = P * K * TN                      # packed row length (lane axis)
    Npad = _SUB * N8

    if Npad > N:
        # Pad pred with a large negative -> sigmoid == 0 exactly; gt with 0.
        pred_f = jnp.pad(pred_f, ((0, 0), (0, Npad - N)),
                         constant_values=-1e9)
        gt_f = jnp.pad(gt_f, ((0, 0), (0, Npad - N)))
    pred_p = pred_f.reshape(ROWS, N8)
    gt_p = gt_f.reshape(ROWS, N8)

    apply_mask = (float(smooth) > 0.0) and (Npad > N)

    kernel = functools.partial(
        _dice_sums_kernel, smooth=float(smooth), n_valid=N, n8=N8, tn=TN,
        k_chunks=K, apply_mask=apply_mask)

    in_spec = pl.BlockSpec((ROWS, TN), lambda p, k: (0, p * K + k))
    out_spec = pl.BlockSpec((1, ROWS, 1), lambda p, k: (p, 0, 0))

    dbuf_bytes = 2 * ROWS * TN * (pred_p.dtype.itemsize + gt_p.dtype.itemsize)
    vmem_limit = min(int(dbuf_bytes * 1.5) + (2 << 20), 30 * 1024 * 1024)

    inter_p, gsum_p, psum_p = pl.pallas_call(
        kernel,
        out_shape=(
            jax.ShapeDtypeStruct((P, ROWS, 1), jnp.float32),
            jax.ShapeDtypeStruct((P, ROWS, 1), jnp.float32),
            jax.ShapeDtypeStruct((P, ROWS, 1), jnp.float32),
        ),
        grid_spec=pltpu.PrefetchScalarGridSpec(
            num_scalar_prefetch=0,
            grid=(P, K),
            in_specs=[in_spec, in_spec],
            out_specs=[out_spec, out_spec, out_spec],
            scratch_shapes=[pltpu.VMEM((ROWS, 1), jnp.float32)] * 3,
        ),
        compiler_params=pltpu.CompilerParams(
            dimension_semantics=("parallel", "arbitrary"),
            vmem_limit_bytes=vmem_limit),
    )(pred_p, gt_p)

    # Fold the parallel halves and the 8 packed sub-rows per batch element.
    inter = inter_p.sum(axis=(0, 2)).reshape(B, _SUB).sum(axis=1)
    gsum = gsum_p.sum(axis=(0, 2)).reshape(B, _SUB).sum(axis=1)
    psum = psum_p.sum(axis=(0, 2)).reshape(B, _SUB).sum(axis=1)

    loss = 1.0 - 2.0 * inter / jnp.maximum(gsum + psum, 1e-8)
    if reduction == "none":
        return loss
    elif reduction == "mean":
        return jnp.mean(loss)
    return jnp.sum(loss)


def _reference(pred, gt, reduction="mean", smooth=0.0):
    """Pure-JAX reference mirroring the PyTorch forward."""
    B = pred.shape[0]
    g = jnp.maximum(gt - 2.0 * smooth, 0.0) + smooth
    p = jax.nn.sigmoid(pred)
    g = g.reshape(B, -1).astype(jnp.float32)
    p = p.reshape(B, -1).astype(jnp.float32)
    inter = jnp.sum(g * p, axis=1)
    loss = 1.0 - 2.0 * inter / jnp.maximum(jnp.sum(g, 1) + jnp.sum(p, 1), 1e-8)
    if reduction == "none":
        return loss
    if reduction == "mean":
        return jnp.mean(loss)
    return jnp.sum(loss)


if __name__ == "__main__":
    key = jax.random.PRNGKey(0)
    k1, k2 = jax.random.split(key)
    B, C, H, W = 2, 1, 16, 16
    pred = jax.random.normal(k1, (B, C, H, W), dtype=jnp.float32)
    # Binary-ish ground truth in {0, 1}
    gt = (jax.random.uniform(k2, (B, C, H, W)) > 0.5).astype(jnp.float32)

    out = binary_dice_loss_with_sigmoid(pred, gt, reduction="mean", smooth=0.1)
    out = jax.block_until_ready(out)

    ref = _reference(pred, gt, reduction="mean", smooth=0.1)
    assert jnp.allclose(out, ref, atol=1e-5, rtol=1e-5), (out, ref)

    print("KERNEL_OK")
</pallas_src>

<mosaic_0001>
module attributes {stable_mosaic.version = 11 : i64} {
  func.func @_dice_sums_kernel(%arg0: i32, %arg1: i32, %arg2: memref<16x128xf32, #tpu.memory_space<vmem>>, %arg3: memref<16x128xf32, #tpu.memory_space<vmem>>, %arg4: memref<1x16x1xf32, #tpu.memory_space<vmem>>, %arg5: memref<1x16x1xf32, #tpu.memory_space<vmem>>, %arg6: memref<1x16x1xf32, #tpu.memory_space<vmem>>, %arg7: memref<16x1xf32, #tpu.memory_space<vmem>>, %arg8: memref<16x1xf32, #tpu.memory_space<vmem>>, %arg9: memref<16x1xf32, #tpu.memory_space<vmem>>) attributes {dimension_semantics = [#tpu.dimension_semantics<parallel>, #tpu.dimension_semantics<arbitrary>], iteration_bounds = array<i64: 1, 1>, scalar_prefetch = 0 : i64, scratch_operands = 3 : i64, tpu.core_type = #tpu.core_type<tc>, window_params = [{transform_indices = @transform_0, window_bounds = array<i64: 16, 128>}, {transform_indices = @transform_1, window_bounds = array<i64: 16, 128>}, {transform_indices = @transform_2, window_bounds = array<i64: 1, 16, 1>}, {transform_indices = @transform_3, window_bounds = array<i64: 1, 16, 1>}, {transform_indices = @transform_4, window_bounds = array<i64: 1, 16, 1>}]} {
    %c0_i32 = arith.constant 0 : i32
    %0 = arith.cmpi eq, %arg1, %c0_i32 : i32
    %1 = arith.extui %0 : i1 to i32
    %c0_i32_0 = arith.constant 0 : i32
    %2 = arith.cmpi ne, %1, %c0_i32_0 : i32
    scf.if %2 {
      %cst_33 = arith.constant 0.000000e+00 : f32
      %67 = vector.broadcast %cst_33 : f32 to vector<16x1xf32>
      %c0_34 = arith.constant 0 : index
      %c0_35 = arith.constant 0 : index
      %68 = vector.load %arg7[%c0_34, %c0_35] : memref<16x1xf32, #tpu.memory_space<vmem>>, vector<16x1xf32>
      tpu.vector_store %arg7[%c0_34, %c0_35], %67 {strides = array<i32>} : memref<16x1xf32, #tpu.memory_space<vmem>>, vector<16x1xf32>,
      %cst_36 = arith.constant 0.000000e+00 : f32
      %69 = vector.broadcast %cst_36 : f32 to vector<16x1xf32>
      %c0_37 = arith.constant 0 : index
      %c0_38 = arith.constant 0 : index
      %70 = vector.load %arg8[%c0_37, %c0_38] : memref<16x1xf32, #tpu.memory_space<vmem>>, vector<16x1xf32>
      tpu.vector_store %arg8[%c0_37, %c0_38], %69 {strides = array<i32>} : memref<16x1xf32, #tpu.memory_space<vmem>>, vector<16x1xf32>,
      %cst_39 = arith.constant 0.000000e+00 : f32
      %71 = vector.broadcast %cst_39 : f32 to vector<16x1xf32>
      %c0_40 = arith.constant 0 : index
      %c0_41 = arith.constant 0 : index
      %72 = vector.load %arg9[%c0_40, %c0_41] : memref<16x1xf32, #tpu.memory_space<vmem>>, vector<16x1xf32>
      tpu.vector_store %arg9[%c0_40, %c0_41], %71 {strides = array<i32>} : memref<16x1xf32, #tpu.memory_space<vmem>>, vector<16x1xf32>,
    } else {
    }
    %c0 = arith.constant 0 : index
    %c0_1 = arith.constant 0 : index
    %3 = vector.load %arg2[%c0, %c0_1] : memref<16x128xf32, #tpu.memory_space<vmem>>, vector<16x128xf32>
    %c0_2 = arith.constant 0 : index
    %c0_3 = arith.constant 0 : index
    %4 = vector.load %arg3[%c0_2, %c0_3] : memref<16x128xf32, #tpu.memory_space<vmem>>, vector<16x128xf32>
    %cst = arith.constant 5.000000e-01 : f32
    %5 = vector.broadcast %cst : f32 to vector<16x128xf32>
    %6 = arith.mulf %5, %3 : vector<16x128xf32>
    %7 = math.tanh %6 : vector<16x128xf32>
    %cst_4 = arith.constant 1.000000e+00 : f32
    %8 = vector.broadcast %cst_4 : f32 to vector<16x128xf32>
    %9 = arith.addf %7, %8 : vector<16x128xf32>
    %cst_5 = arith.constant 5.000000e-01 : f32
    %10 = vector.broadcast %cst_5 : f32 to vector<16x128xf32>
    %11 = arith.mulf %10, %9 : vector<16x128xf32>
    %cst_6 = arith.constant 2.000000e-01 : f32
    %12 = vector.broadcast %cst_6 : f32 to vector<16x128xf32>
    %13 = arith.subf %4, %12 : vector<16x128xf32>
    %cst_7 = arith.constant 0.000000e+00 : f32
    %14 = vector.broadcast %cst_7 : f32 to vector<16x128xf32>
    %15 = arith.maximumf %13, %14 : vector<16x128xf32>
    %cst_8 = arith.constant 1.000000e-01 : f32
    %16 = vector.broadcast %cst_8 : f32 to vector<16x128xf32>
    %17 = arith.addf %15, %16 : vector<16x128xf32>
    %18 = tpu.iota {dimensions = array<i32: 0>} : vector<16x128xi32>
    %c8_i32 = arith.constant 8 : i32
    %c0_i32_9 = arith.constant 0 : i32
    %19 = arith.cmpi eq, %c8_i32, %c0_i32_9 : i32
    %c1_i32 = arith.constant 1 : i32
    %20 = arith.select %19, %c1_i32, %c8_i32 : i32
    %21 = vector.broadcast %20 : i32 to vector<16x128xi32>
    %22 = arith.remsi %18, %21 : vector<16x128xi32>
    %c0_i32_10 = arith.constant 0 : i32
    %23 = vector.broadcast %c0_i32_10 : i32 to vector<16x128xi32>
    %24 = arith.cmpi ne, %22, %23 : vector<16x128xi32>
    %c0_i32_11 = arith.constant 0 : i32
    %25 = vector.broadcast %c0_i32_11 : i32 to vector<16x128xi32>
    %26 = arith.cmpi slt, %22, %25 : vector<16x128xi32>
    %c0_i32_12 = arith.constant 0 : i32
    %27 = arith.cmpi slt, %20, %c0_i32_12 : i32
    %28 = vector.broadcast %27 : i1 to vector<16x128xi1>
    %29 = vector.broadcast %28 : vector<16x128xi1> to vector<16x128xi1>
    %30 = arith.xori %26, %29 : vector<16x128xi1>
    %31 = arith.andi %30, %24 : vector<16x128xi1>
    %32 = vector.broadcast %20 : i32 to vector<16x128xi32>
    %33 = arith.addi %22, %32 : vector<16x128xi32>
    %34 = arith.select %31, %33, %22 : vector<16x128xi1>, vector<16x128xi32>
    %c1_i32_13 = arith.constant 1 : i32
    %35 = arith.muli %arg0, %c1_i32_13 : i32
    %36 = arith.addi %35, %arg1 : i32
    %c128_i32 = arith.constant 128 : i32
    %37 = arith.muli %36, %c128_i32 : i32
    %38 = tpu.iota {dimensions = array<i32: 1>} : vector<16x128xi32>
    %39 = vector.broadcast %37 : i32 to vector<16x128xi32>
    %40 = arith.addi %39, %38 : vector<16x128xi32>
    %c128_i32_14 = arith.constant 128 : i32
    %41 = vector.broadcast %c128_i32_14 : i32 to vector<16x128xi32>
    %42 = arith.muli %34, %41 : vector<16x128xi32>
    %43 = arith.addi %42, %40 : vector<16x128xi32>
    %c256_i32 = arith.constant 256 : i32
    %44 = vector.broadcast %c256_i32 : i32 to vector<16x128xi32>
    %45 = arith.cmpi slt, %43, %44 : vector<16x128xi32>
    %cst_15 = arith.constant 0.000000e+00 : f32
    %46 = vector.broadcast %cst_15 : f32 to vector<16x128xf32>
    %47 = arith.select %45, %17, %46 : vector<16x128xi1>, vector<16x128xf32>
    %c0_16 = arith.constant 0 : index
    %c0_17 = arith.constant 0 : index
    %48 = vector.load %arg7[%c0_16, %c0_17] : memref<16x1xf32, #tpu.memory_space<vmem>>, vector<16x1xf32>
    %49 = arith.mulf %47, %11 : vector<16x128xf32>
    %cst_18 = arith.constant dense<0.000000e+00> : vector<16xf32>
    %50 = vector.multi_reduction <add>, %49, %cst_18 [1] : vector<16x128xf32> to vector<16xf32>
    %51 = vector.shape_cast %50 : vector<16xf32> to vector<16x1xf32>
    %52 = arith.addf %48, %51 : vector<16x1xf32>
    %c0_19 = arith.constant 0 : index
    %c0_20 = arith.constant 0 : index
    %53 = vector.load %arg7[%c0_19, %c0_20] : memref<16x1xf32, #tpu.memory_space<vmem>>, vector<16x1xf32>
    tpu.vector_store %arg7[%c0_19, %c0_20], %52 {strides = array<i32>} : memref<16x1xf32, #tpu.memory_space<vmem>>, vector<16x1xf32>,
    %c0_21 = arith.constant 0 : index
    %c0_22 = arith.constant 0 : index
    %54 = vector.load %arg8[%c0_21, %c0_22] : memref<16x1xf32, #tpu.memory_space<vmem>>, vector<16x1xf32>
    %cst_23 = arith.constant dense<0.000000e+00> : vector<16xf32>
    %55 = vector.multi_reduction <add>, %47, %cst_23 [1] : vector<16x128xf32> to vector<16xf32>
    %56 = vector.shape_cast %55 : vector<16xf32> to vector<16x1xf32>
    %57 = arith.addf %54, %56 : vector<16x1xf32>
    %c0_24 = arith.constant 0 : index
    %c0_25 = arith.constant 0 : index
    %58 = vector.load %arg8[%c0_24, %c0_25] : memref<16x1xf32, #tpu.memory_space<vmem>>, vector<16x1xf32>
    tpu.vector_store %arg8[%c0_24, %c0_25], %57 {strides = array<i32>} : memref<16x1xf32, #tpu.memory_space<vmem>>, vector<16x1xf32>,
    %c0_26 = arith.constant 0 : index
    %c0_27 = arith.constant 0 : index
    %59 = vector.load %arg9[%c0_26, %c0_27] : memref<16x1xf32, #tpu.memory_space<vmem>>, vector<16x1xf32>
    %cst_28 = arith.constant dense<0.000000e+00> : vector<16xf32>
    %60 = vector.multi_reduction <add>, %11, %cst_28 [1] : vector<16x128xf32> to vector<16xf32>
    %61 = vector.shape_cast %60 : vector<16xf32> to vector<16x1xf32>
    %62 = arith.addf %59, %61 : vector<16x1xf32>
    %c0_29 = arith.constant 0 : index
    %c0_30 = arith.constant 0 : index
    %63 = vector.load %arg9[%c0_29, %c0_30] : memref<16x1xf32, #tpu.memory_space<vmem>>, vector<16x1xf32>
    tpu.vector_store %arg9[%c0_29, %c0_30], %62 {strides = array<i32>} : memref<16x1xf32, #tpu.memory_space<vmem>>, vector<16x1xf32>,
    %c0_i32_31 = arith.constant 0 : i32
    %64 = arith.cmpi eq, %arg1, %c0_i32_31 : i32
    %65 = arith.extui %64 : i1 to i32
    %c0_i32_32 = arith.constant 0 : i32
    %66 = arith.cmpi ne, %65, %c0_i32_32 : i32
    scf.if %66 {
      %c0_33 = arith.constant 0 : index
      %c0_34 = arith.constant 0 : index
      %67 = vector.load %arg7[%c0_33, %c0_34] : memref<16x1xf32, #tpu.memory_space<vmem>>, vector<16x1xf32>
      %68 = vector.shape_cast %67 : vector<16x1xf32> to vector<1x16x1xf32>
      %c0_35 = arith.constant 0 : index
      %c0_36 = arith.constant 0 : index
      %c0_37 = arith.constant 0 : index
      %69 = vector.load %arg4[%c0_35, %c0_36, %c0_37] : memref<1x16x1xf32, #tpu.memory_space<vmem>>, vector<1x16x1xf32>
      tpu.vector_store %arg4[%c0_35, %c0_36, %c0_37], %68 {strides = array<i32>} : memref<1x16x1xf32, #tpu.memory_space<vmem>>, vector<1x16x1xf32>,
      %c0_38 = arith.constant 0 : index
      %c0_39 = arith.constant 0 : index
      %70 = vector.load %arg8[%c0_38, %c0_39] : memref<16x1xf32, #tpu.memory_space<vmem>>, vector<16x1xf32>
      %71 = vector.shape_cast %70 : vector<16x1xf32> to vector<1x16x1xf32>
      %c0_40 = arith.constant 0 : index
      %c0_41 = arith.constant 0 : index
      %c0_42 = arith.constant 0 : index
      %72 = vector.load %arg5[%c0_40, %c0_41, %c0_42] : memref<1x16x1xf32, #tpu.memory_space<vmem>>, vector<1x16x1xf32>
      tpu.vector_store %arg5[%c0_40, %c0_41, %c0_42], %71 {strides = array<i32>} : memref<1x16x1xf32, #tpu.memory_space<vmem>>, vector<1x16x1xf32>,
      %c0_43 = arith.constant 0 : index
      %c0_44 = arith.constant 0 : index
      %73 = vector.load %arg9[%c0_43, %c0_44] : memref<16x1xf32, #tpu.memory_space<vmem>>, vector<16x1xf32>
      %74 = vector.shape_cast %73 : vector<16x1xf32> to vector<1x16x1xf32>
      %c0_45 = arith.constant 0 : index
      %c0_46 = arith.constant 0 : index
      %c0_47 = arith.constant 0 : index
      %75 = vector.load %arg6[%c0_45, %c0_46, %c0_47] : memref<1x16x1xf32, #tpu.memory_space<vmem>>, vector<1x16x1xf32>
      tpu.vector_store %arg6[%c0_45, %c0_46, %c0_47], %74 {strides = array<i32>} : memref<1x16x1xf32, #tpu.memory_space<vmem>>, vector<1x16x1xf32>,
    } else {
    }
    return
  }
  func.func @transform_0(%arg0: i32, %arg1: i32) -> (i32, i32) {
    %c1_i32 = arith.constant 1 : i32
    %0 = arith.muli %arg0, %c1_i32 : i32
    %1 = arith.addi %0, %arg1 : i32
    %c0_i32 = arith.constant 0 : i32
    %c0_i32_0 = arith.constant 0 : i32
    return %c0_i32, %1 : i32, i32
  }
  func.func @transform_1(%arg0: i32, %arg1: i32) -> (i32, i32) {
    %c1_i32 = arith.constant 1 : i32
    %0 = arith.muli %arg0, %c1_i32 : i32
    %1 = arith.addi %0, %arg1 : i32
    %c0_i32 = arith.constant 0 : i32
    %c0_i32_0 = arith.constant 0 : i32
    return %c0_i32, %1 : i32, i32
  }
  func.func @transform_2(%arg0: i32, %arg1: i32) -> (i32, i32, i32) {
    %c0_i32 = arith.constant 0 : i32
    %c0_i32_0 = arith.constant 0 : i32
    %c0_i32_1 = arith.constant 0 : i32
    return %arg0, %c0_i32, %c0_i32_0 : i32, i32, i32
  }
  func.func @transform_3(%arg0: i32, %arg1: i32) -> (i32, i32, i32) {
    %c0_i32 = arith.constant 0 : i32
    %c0_i32_0 = arith.constant 0 : i32
    %c0_i32_1 = arith.constant 0 : i32
    return %arg0, %c0_i32, %c0_i32_0 : i32, i32, i32
  }
  func.func @transform_4(%arg0: i32, %arg1: i32) -> (i32, i32, i32) {
    %c0_i32 = arith.constant 0 : i32
    %c0_i32_0 = arith.constant 0 : i32
    %c0_i32_1 = arith.constant 0 : i32
    return %arg0, %c0_i32, %c0_i32_0 : i32, i32, i32
  }
}

</mosaic_0001>

<llo_original>
// kernel: tpu_custom_call.1
$region0: #{tpu_custom_call.1}
  #allocation0 [shape = 'u32[]', space=smem, size = 0x4, offset = 0x4, fixed_abs, tag = 'smem constant byte address 0x4 - core index']
  #allocation1 [shape = 'u32[144,128]{1,0:T(1,128)}', space=vmem, size = 0x12000, scoped, tag = 'internal scratch']
  #allocation2 [shape = 'f32[16,1]{1,0:T(8,128)}', space=vmem, size = 0x2000, scoped, tag = 'scratch operand']
  #allocation3 [shape = 'f32[16,1]{1,0:T(8,128)}', space=vmem, size = 0x2000, scoped, tag = 'scratch operand']
  #allocation4 [shape = 'f32[16,1]{1,0:T(8,128)}', space=vmem, size = 0x2000, scoped, tag = 'scratch operand']
  %s0 = inlined_call_operand.hbm [shape: f32[16,128], index: 0, kind: input, shape index: {}]
  %s1 = inlined_call_operand.hbm [shape: f32[16,128], index: 1, kind: input, shape index: {}]
  %s2 = inlined_call_operand.vmem [shape: f32[1,16,1], index: 2, kind: output, shape index: {0}]
  %s3 = inlined_call_operand.vmem [shape: f32[1,16,1], index: 3, kind: output, shape index: {1}]
  %s4 = inlined_call_operand.vmem [shape: f32[1,16,1], index: 4, kind: output, shape index: {2}]
  %5 = xla_tuple %s2, %s3, %s4
  %s6 = sld [smem:[#allocation0]]
  $region50: #{tpu_custom_call.1} parent=0
    _
  %s8 = ssub.s32 1, %s6
  %s9 = scalar_select 0, %s8, %s6
  $region1: #{tpu_custom_call.1} parent=0
    #allocation5 [shape = 'u8[8192]{0}', space=vmem, size = 0x2000, scoped, tag = 'input window, operand 0, single buffered']
    #allocation6 [shape = 's32[1]{0}', space=sflag, size = 0x4, scoped, tag = 'scoped memory for tpu_custom_call.1']
    #allocation7 [shape = 'u8[8192]{0}', space=vmem, size = 0x2000, scoped, tag = 'input window, operand 1, single buffered']
    #allocation8 [shape = 's32[1]{0}', space=sflag, size = 0x4, scoped, tag = 'scoped memory for tpu_custom_call.1']
    %10 = vsyncpa [#allocation6], 0
    %11 = vsyncpa [#allocation8], 0
    // Predicated region
    $region2: #{tpu_custom_call.1} parent=1 // pred_check
      _
    $region3: #{tpu_custom_call.1} parent=1 // pred_check_branch
      %13 = sbr.rel (0) target = $region5
    $region4: #{tpu_custom_call.1} parent=1 // pred_region
      %s14 = sadd.s32 0, 0
      %s16 = ssub.s32 256, 256
      %17 = vsyncadd [#allocation6], %s16
      %s18 = smul.addr %s14, 128
      %s19 = scalar_lea.hbm %s0, %s18
      %s20 = sshll.u32 [#allocation5], 4
      %s21 = int_to_ptr.vmem [resolvable:$true] %s20
      %26 = dma.hbm_to_vmem [thread:$0]  %s19, 256, %s21, [#allocation6], 128, 128, 8
    $region5: #{tpu_custom_call.1} parent=1 // pred_fallthru
      _
    // Predicated region
    $region6: #{tpu_custom_call.1} parent=1 // pred_check
      _
    $region7: #{tpu_custom_call.1} parent=1 // pred_check_branch
      %28 = sbr.rel (0) target = $region9
    $region8: #{tpu_custom_call.1} parent=1 // pred_region
      %s29 = sadd.s32 0, 0
      %s31 = ssub.s32 256, 256
      %32 = vsyncadd [#allocation8], %s31
      %s33 = smul.addr %s29, 128
      %s34 = scalar_lea.hbm %s1, %s33
      %s35 = sshll.u32 [#allocation7], 4
      %s36 = int_to_ptr.vmem [resolvable:$true] %s35
      %41 = dma.hbm_to_vmem [thread:$0]  %s34, 256, %s36, [#allocation8], 128, 128, 8
    $region9: #{tpu_custom_call.1} parent=1 // pred_fallthru
      _
    // Predicated region
    $region10: #{tpu_custom_call.1} parent=1 // pred_check
      _
    $region11: #{tpu_custom_call.1} parent=1 // pred_check_branch
      %43 = sbr.rel (0) target = $region13
    $region12: #{tpu_custom_call.1} parent=1 // pred_region
      %44 = dma.done [#allocation6], 256
    $region13: #{tpu_custom_call.1} parent=1 // pred_fallthru
      _
    // Predicated region
    $region14: #{tpu_custom_call.1} parent=1 // pred_check
      _
    $region15: #{tpu_custom_call.1} parent=1 // pred_check_branch
      %46 = sbr.rel (0) target = $region17
    $region16: #{tpu_custom_call.1} parent=1 // pred_region
      %47 = dma.done [#allocation8], 256
    $region17: #{tpu_custom_call.1} parent=1 // pred_fallthru
      _
    %s48 = sadd.s32 0, 0
    %s49 = sadd.s32 0, 0
    %p50 = scmp.eq.s32.totalorder 0, 0
    // Predicated region
    $region18: #{tpu_custom_call.1} parent=1 // pred_check
      %p51 = pneg %p50
    $region19: #{tpu_custom_call.1} parent=1 // pred_check_branch
      %53 = sbr.rel (%p51) target = $region21
    $region20: #{tpu_custom_call.1} parent=1 // pred_region
      %vm54 = vcmask 7168
      %55 = vst.msk [vmem:[#allocation2] sm:$0xff] %vm54, 0.0
      %56 = vst.msk [vmem:[#allocation2 + $0x8] sm:$0xff] %vm54, 0.0
      %57 = vst.msk [vmem:[#allocation3] sm:$0xff] %vm54, 0.0
      %58 = vst.msk [vmem:[#allocation3 + $0x8] sm:$0xff] %vm54, 0.0
      %59 = vst.msk [vmem:[#allocation4] sm:$0xff] %vm54, 0.0
      %60 = vst.msk [vmem:[#allocation4 + $0x8] sm:$0xff] %vm54, 0.0
    $region21: #{tpu_custom_call.1} parent=1 // pred_fallthru
      _
    %v61 = vld [vmem:[#allocation5] sm:$0xff]
    %v62 = vld [vmem:[#allocation5 + $0x8] sm:$0xff]
    %v63 = vld [vmem:[#allocation7] sm:$0xff]
    %v64 = vld [vmem:[#allocation7 + $0x8] sm:$0xff]
    %v65 = vmul.f32 %v61, 0.5
    %v66 = vmul.f32 %v62, 0.5
    %v67 = vtanh.pop %v65
    %v68 = vtanh.pop %v66
    %v69 = vadd.f32 %v67, 1.0
    %v70 = vadd.f32 %v68, 1.0
    %v71 = vmul.f32 %v69, 0.5
    %v72 = vmul.f32 %v70, 0.5
    %v73 = vsub.f32 %v63, 0.2
    %v74 = vsub.f32 %v64, 0.2
    %v75 = vmax.f32 %v73, 0.0
    %v76 = vmax.f32 %v74, 0.0
    %v77 = vadd.f32 %v75, 0.1
    %v78 = vadd.f32 %v76, 0.1
    %v79 = vlaneseq
    %v80 = vshrl.u32 %v79, 7
    %v81 = vadd.s32 %v80, 8
    %vm82 = vcmp.lt.s32.totalorder %v80, 0
    %v83 = vsub.s32 0, %v80
    %v84 = vsel %vm82, %v83, %v80
    %v85 = vshrl.u32 %v84, 3
    %v86 = vand.u32 %v84, 7
    %v87 = vsub.s32 0, %v86
    %v88 = vsel %vm82, %v87, %v86
    %vm89 = vcmp.lt.s32.totalorder %v81, 0
    %v90 = vsub.s32 0, %v81
    %v91 = vsel %vm89, %v90, %v81
    %v92 = vshrl.u32 %v91, 3
    %v93 = vand.u32 %v91, 7
    %v94 = vsub.s32 0, %v93
    %v95 = vsel %vm89, %v94, %v93
    %vm96 = vcmp.ne.s32.totalorder %v88, 0
    %vm97 = vcmp.ne.s32.totalorder %v95, 0
    %vm98 = vcmp.lt.s32.totalorder %v88, 0
    %vm99 = vcmp.lt.s32.totalorder %v95, 0
    %vm100 = vmand %vm98, %vm96
    %vm101 = vmand %vm99, %vm97
    %v102 = vadd.s32 %v88, 8
    %v103 = vadd.s32 %v95, 8
    %v104 = vsel %vm100, %v102, %v88
    %v105 = vsel %vm101, %v103, %v95
    %s106 = sadd.s32 0, 0
    %s107 = smul.u32 %s106, 128
    %v108 = vlaneseq
    %v109 = vand.u32 %v108, 127
    %v110 = vstv %s107
    %v111 = vadd.s32 %v110, %v109
    %v112 = vmul.u32 %v104, 128
    %v113 = vmul.u32 %v105, 128
    %v114 = vadd.s32 %v112, %v111
    %v115 = vadd.s32 %v113, %v111
    %vm116 = vcmp.lt.s32.totalorder %v114, 256
    %vm117 = vcmp.lt.s32.totalorder %v115, 256
    %v118 = vsel %vm116, %v77, 0.0
    %v119 = vsel %vm117, %v78, 0.0
    %v120 = vld [vmem:[#allocation2] sm:$0xff]
    %v121 = vld [vmem:[#allocation2 + $0x8] sm:$0xff]
    %v122 = vmul.f32 %v118, %v71
    %v123 = vmul.f32 %v119, %v72
    %124 = vadd.xlane.f32.xlu0 %v122
    %v125 = vpop.xlane.xlu0 %124
    %126 = vadd.xlane.f32.xlu0 %v123
    %v127 = vpop.xlane.xlu0 %126
    %v128 = vadd.f32 %v120, %v125
    %v129 = vadd.f32 %v121, %v127
    %vm130 = vcmask 7168
    %131 = vst.msk [vmem:[#allocation2] sm:$0xff] %vm130, %v128
    %132 = vst.msk [vmem:[#allocation2 + $0x8] sm:$0xff] %vm130, %v129
    %v133 = vld [vmem:[#allocation3] sm:$0xff]
    %v134 = vld [vmem:[#allocation3 + $0x8] sm:$0xff]
    %135 = vadd.xlane.f32.xlu0 %v118
    %v136 = vpop.xlane.xlu0 %135
    %137 = vadd.xlane.f32.xlu0 %v119
    %v138 = vpop.xlane.xlu0 %137
    %v139 = vadd.f32 %v133, %v136
    %v140 = vadd.f32 %v134, %v138
    %141 = vst.msk [vmem:[#allocation3] sm:$0xff] %vm130, %v139
    %142 = vst.msk [vmem:[#allocation3 + $0x8] sm:$0xff] %vm130, %v140
    %v143 = vld [vmem:[#allocation4] sm:$0xff]
    %v144 = vld [vmem:[#allocation4 + $0x8] sm:$0xff]
    %145 = vadd.xlane.f32.xlu0 %v71
    %v146 = vpop.xlane.xlu0 %145
    %147 = vadd.xlane.f32.xlu0 %v72
    %v148 = vpop.xlane.xlu0 %147
    %v149 = vadd.f32 %v143, %v146
    %v150 = vadd.f32 %v144, %v148
    %151 = vst.msk [vmem:[#allocation4] sm:$0xff] %vm130, %v149
    %152 = vst.msk [vmem:[#allocation4 + $0x8] sm:$0xff] %vm130, %v150
    // Predicated region
    $region22: #{tpu_custom_call.1} parent=1 // pred_check
      %p153 = pneg %p50
    $region23: #{tpu_custom_call.1} parent=1 // pred_check_branch
      %155 = sbr.rel (%p153) target = $region25
    $region24: #{tpu_custom_call.1} parent=1 // pred_region
      %v156 = vld [vmem:[#allocation2] sm:$0xff]
      %v157 = vld [vmem:[#allocation2 + $0x8] sm:$0xff]
      %158 = vst.msk [vmem:[%s2] sm:$0xff] %vm130, %v156
      %159 = vst.msk [vmem:[%s2 + $0x8] sm:$0xff] %vm130, %v157
      %v160 = vld [vmem:[#allocation3] sm:$0xff]
      %v161 = vld [vmem:[#allocation3 + $0x8] sm:$0xff]
      %162 = vst.msk [vmem:[%s3] sm:$0xff] %vm130, %v160
      %163 = vst.msk [vmem:[%s3 + $0x8] sm:$0xff] %vm130, %v161
      %v164 = vld [vmem:[#allocation4] sm:$0xff]
      %v165 = vld [vmem:[#allocation4 + $0x8] sm:$0xff]
      %166 = vst.msk [vmem:[%s4] sm:$0xff] %vm130, %v164
      %167 = vst.msk [vmem:[%s4 + $0x8] sm:$0xff] %vm130, %v165
    $region25: #{tpu_custom_call.1} parent=1 // pred_fallthru
      _
    // Predicated region
    $region26: #{tpu_custom_call.1} parent=1 // pred_check
      _
    $region27: #{tpu_custom_call.1} parent=1 // pred_check_branch
      %169 = sbr.rel (0) target = $region29
    $region28: #{tpu_custom_call.1} parent=1 // pred_region
      _
    $region29: #{tpu_custom_call.1} parent=1 // pred_fallthru
      _
    // Predicated region
    $region30: #{tpu_custom_call.1} parent=1 // pred_check
      _
    $region31: #{tpu_custom_call.1} parent=1 // pred_check_branch
      %171 = sbr.rel (0) target = $region33
    $region32: #{tpu_custom_call.1} parent=1 // pred_region
      _
    $region33: #{tpu_custom_call.1} parent=1 // pred_fallthru
      _
    // Predicated region
    $region34: #{tpu_custom_call.1} parent=1 // pred_check
      _
    $region35: #{tpu_custom_call.1} parent=1 // pred_check_branch
      %173 = sbr.rel (0) target = $region37
    $region36: #{tpu_custom_call.1} parent=1 // pred_region
      _
    $region37: #{tpu_custom_call.1} parent=1 // pred_fallthru
      _
    // Predicated region
    $region38: #{tpu_custom_call.1} parent=1 // pred_check
      _
    $region39: #{tpu_custom_call.1} parent=1 // pred_check_branch
      %175 = sbr.rel (0) target = $region41
    $region40: #{tpu_custom_call.1} parent=1 // pred_region
      _
    $region41: #{tpu_custom_call.1} parent=1 // pred_fallthru
      _
    // Predicated region
    $region42: #{tpu_custom_call.1} parent=1 // pred_check
      _
    $region43: #{tpu_custom_call.1} parent=1 // pred_check_branch
      %177 = sbr.rel (0) target = $region45
    $region44: #{tpu_custom_call.1} parent=1 // pred_region
      _
    $region45: #{tpu_custom_call.1} parent=1 // pred_fallthru
      _
    // Predicated region
    $region46: #{tpu_custom_call.1} parent=1 // pred_check
      _
    $region47: #{tpu_custom_call.1} parent=1 // pred_check_branch
      %179 = sbr.rel (0) target = $region49
    $region48: #{tpu_custom_call.1} parent=1 // pred_region
      _
    $region49: #{tpu_custom_call.1} parent=1 // pred_fallthru
      _
    %180 = vsyncpa [#allocation6], 1
    %181 = vsyncpa [#allocation8], 1

</llo_original>
